<compile_context>
chip_gen: v7x
topology: tpu7x:2x2x1
jax: 0.10.0
libtpu: 0.0.40
codegen_flags: <defaults>
</compile_context>

<pallas_src>
from functools import partial

import jax
import jax.numpy as jnp
from jax import lax
from jax.experimental import pallas as pl
from jax.experimental.pallas import tpu as pltpu


# ---------------- tile-size helpers ----------------

def _output_tile(dim, preferred, align):
    """Tile for a non-reduction axis (padded trailing block is harmless)."""
    if dim <= preferred:
        return dim
    return max(align, (preferred // align) * align)


def _reduction_tile(dim, preferred, align):
    """Tile for the contraction axis: must divide `dim` exactly."""
    if dim <= preferred:
        return dim
    t = (preferred // align) * align
    while t >= align:
        if dim % t == 0:
            return t
        t -= align
    return dim  # fall back to a single full-K block


# ---------------- tiled projection matmuls ----------------

def _matmul_kernel(x_ref, w_ref, o_ref, acc_ref):
    @pl.when(pl.program_id(2) == 0)
    def _init():
        acc_ref[...] = jnp.zeros_like(acc_ref)

    acc_ref[...] += jnp.dot(x_ref[...], w_ref[...],
                            preferred_element_type=jnp.float32)

    @pl.when(pl.program_id(2) == pl.num_programs(2) - 1)
    def _store():
        o_ref[...] = acc_ref[...].astype(o_ref.dtype)


def _matmul_bias_kernel(x_ref, w_ref, b_ref, o_ref, acc_ref):
    @pl.when(pl.program_id(2) == 0)
    def _init():
        acc_ref[...] = jnp.zeros_like(acc_ref)

    acc_ref[...] += jnp.dot(x_ref[...], w_ref[...],
                            preferred_element_type=jnp.float32)

    @pl.when(pl.program_id(2) == pl.num_programs(2) - 1)
    def _store():
        o_ref[...] = (acc_ref[...] + b_ref[...].astype(jnp.float32)
                      ).astype(o_ref.dtype)


def _tiled_matmul(x2d, w, bias=None, *, tm=256, tn=512, tk=512):
    """x2d: (M, K) @ w: (K, N) [+ bias (N,)] with M/N/K tiling + f32 accum."""
    M, K = x2d.shape
    Kw, N = w.shape
    assert K == Kw
    tm = _output_tile(M, tm, 8)        # sublane-aligned
    tn = _output_tile(N, tn, 128)      # lane-aligned, wide for dense stores
    tk = _reduction_tile(K, tk, 128)   # must divide K (no masked reduction)
    grid = (pl.cdiv(M, tm), pl.cdiv(N, tn), K // tk)

    in_specs = [
        pl.BlockSpec((tm, tk), lambda i, j, k: (i, k)),
        pl.BlockSpec((tk, tn), lambda i, j, k: (k, j)),
    ]
    args = (x2d, w)
    kernel = _matmul_kernel
    if bias is not None:
        in_specs.append(pl.BlockSpec((1, tn), lambda i, j, k: (0, j)))
        args = (x2d, w, bias.reshape(1, N))
        kernel = _matmul_bias_kernel

    return pl.pallas_call(
        kernel,
        out_shape=jax.ShapeDtypeStruct((M, N), x2d.dtype),
        grid_spec=pltpu.PrefetchScalarGridSpec(
            num_scalar_prefetch=0,
            grid=grid,
            in_specs=in_specs,
            out_specs=pl.BlockSpec((tm, tn), lambda i, j, k: (i, j)),
            scratch_shapes=[pltpu.VMEM((tm, tn), jnp.float32)],
        ),
        compiler_params=pltpu.CompilerParams(
            dimension_semantics=("parallel", "parallel", "arbitrary"),
            vmem_limit_bytes=32 * 1024 * 1024,
        ),
    )(*args)


# ---------------- attention kernels ----------------

def _head_attention(q, k, v, scale, out_dtype):
    """softmax(q k^T * scale) v for one head; f32 scores/softmax, MXU in model dtype."""
    s = lax.dot_general(q, k, (((1,), (1,)), ((), ())),
                        preferred_element_type=jnp.float32)
    s = s * scale
    s = s - jnp.max(s, axis=-1, keepdims=True)
    p = jnp.exp(s)
    inv = pl.reciprocal(jnp.sum(p, axis=-1, keepdims=True), approx=False)
    o = jnp.dot((p * inv).astype(v.dtype), v, preferred_element_type=jnp.float32)
    return o.astype(out_dtype)


def _attention_kernel_split(q_ref, k_ref, v_ref, o_ref, *, num_heads, head_dim, scale):
    # q_ref: (1, tq, C) query columns only; k_ref/v_ref: (1, N, C), resident per batch
    # o_ref: (1, tq, C) written once as a lane-dense tile
    outs = []
    for h in range(num_heads):
        sl = slice(h * head_dim, (h + 1) * head_dim)
        outs.append(_head_attention(q_ref[0, :, sl], k_ref[0, :, sl],
                                    v_ref[0, :, sl], scale, o_ref.dtype))
    o_ref[0, :, :] = jnp.concatenate(outs, axis=-1)


def _attention_kernel_fused(q_ref, kv_ref, o_ref, *, num_heads, head_dim, scale):
    # Fallback (C not lane-aligned): q_ref (1, tq, 3C), kv_ref (1, N, 3C).
    C = num_heads * head_dim
    outs = []
    for h in range(num_heads):
        lo = h * head_dim
        q = q_ref[0, :, lo:lo + head_dim]
        k = kv_ref[0, :, C + lo:C + lo + head_dim]
        v = kv_ref[0, :, 2 * C + lo:2 * C + lo + head_dim]
        outs.append(_head_attention(q, k, v, scale, o_ref.dtype))
    o_ref[0, :, :] = jnp.concatenate(outs, axis=-1)


def _multihead_attention(qkv, B, N, C, H, D, scale, out_dtype):
    tq = _output_tile(N, 256, 8)
    grid = (B, pl.cdiv(N, tq))
    out_spec = pl.BlockSpec((1, tq, C), lambda b, qi: (b, qi, 0))
    common = dict(
        out_shape=jax.ShapeDtypeStruct((B, N, C), out_dtype),
        compiler_params=pltpu.CompilerParams(
            dimension_semantics=("parallel", "parallel"),
            vmem_limit_bytes=32 * 1024 * 1024,
        ),
    )
    # TODO(synk): for very long sequences, add a KV grid axis with an
    # online-softmax (flash-style) accumulator to bound the (tq, N) scores.
    if C % 128 == 0:
        # q / k / v column groups selected directly by the BlockSpec block index
        # along the 3C axis: only the needed columns are DMA'd from HBM.
        return pl.pallas_call(
            partial(_attention_kernel_split, num_heads=H, head_dim=D, scale=scale),
            grid_spec=pltpu.PrefetchScalarGridSpec(
                num_scalar_prefetch=0,
                grid=grid,
                in_specs=[
                    pl.BlockSpec((1, tq, C), lambda b, qi: (b, qi, 0)),  # q
                    pl.BlockSpec((1, N, C), lambda b, qi: (b, 0, 1)),    # k (resident)
                    pl.BlockSpec((1, N, C), lambda b, qi: (b, 0, 2)),    # v (resident)
                ],
                out_specs=out_spec,
            ),
            **common,
        )(qkv, qkv, qkv)
    # Non-lane-aligned C: channel blocks must span the full 3C axis.
    return pl.pallas_call(
        partial(_attention_kernel_fused, num_heads=H, head_dim=D, scale=scale),
        grid_spec=pltpu.PrefetchScalarGridSpec(
            num_scalar_prefetch=0,
            grid=grid,
            in_specs=[
                pl.BlockSpec((1, tq, 3 * C), lambda b, qi: (b, qi, 0)),
                pl.BlockSpec((1, N, 3 * C), lambda b, qi: (b, 0, 0)),
            ],
            out_specs=out_spec,
        ),
        **common,
    )(qkv, qkv)


# ---------------- wrapper ----------------

def attention_forward(x, w_qkv, w_proj, b_proj, num_heads, *, qk_scale=None):
    """x: (B, N, C); w_qkv: (C, 3C); w_proj: (C, C); b_proj: (C,)."""
    B, N, C = x.shape
    H = num_heads
    D = C // H
    scale = qk_scale if qk_scale is not None else D ** (-0.5)

    # --- qkv projection (no bias), tiled ---
    qkv = _tiled_matmul(x.reshape(B * N, C), w_qkv).reshape(B, N, 3 * C)

    # --- multi-head attention: all heads of a (batch, query-tile) per step ---
    attn_out = _multihead_attention(qkv, B, N, C, H, D, scale, x.dtype)

    # --- output projection (with bias), tiled; attn_out already (B, N, C) ---
    out = _tiled_matmul(attn_out.reshape(B * N, C), w_proj, b_proj)

    # attn_drop / proj_drop are identities (p = 0.0 at inference).
    return out.reshape(B, N, C)


# ---------------- pure-JAX reference for correctness ----------------

def attention_reference(x, w_qkv, w_proj, b_proj, num_heads):
    B, N, C = x.shape
    H = num_heads
    D = C // H
    scale = D ** (-0.5)
    qkv = (x.reshape(B * N, C) @ w_qkv).reshape(B, N, 3, H, D).transpose(2, 0, 3, 1, 4)
    q, k, v = qkv[0], qkv[1], qkv[2]
    attn = jax.nn.softmax((q * scale) @ jnp.swapaxes(k, -2, -1), axis=-1)
    y = (attn @ v).transpose(0, 2, 1, 3).reshape(B * N, C)
    return (y @ w_proj + b_proj).reshape(B, N, C)


if __name__ == "__main__":
    B, N, C, H = 2, 16, 128, 4  # dim=128, num_heads=4, head_dim=32
    key = jax.random.PRNGKey(0)
    k1, k2, k3, k4 = jax.random.split(key, 4)

    x = jax.random.normal(k1, (B, N, C), dtype=jnp.float32)
    # nn.Linear(dim, 3*dim, bias=False): weight (3C, C); stored transposed (C, 3C)
    w_qkv = jax.random.normal(k2, (C, 3 * C), dtype=jnp.float32) * 0.1
    # nn.Linear(dim, dim): weight (C, C) transposed + bias (C,)
    w_proj = jax.random.normal(k3, (C, C), dtype=jnp.float32) * 0.1
    b_proj = jax.random.normal(k4, (C,), dtype=jnp.float32) * 0.1

    out = attention_forward(x, w_qkv, w_proj, b_proj, H)
    jax.block_until_ready(out)

    ref = attention_reference(x, w_qkv, w_proj, b_proj, H)
    assert out.shape == (B, N, C)
    assert jnp.allclose(out, ref, atol=2e-3, rtol=2e-3), "mismatch vs reference"

    print("KERNEL_OK")
</pallas_src>

<mosaic_0001>
module attributes {stable_mosaic.version = 11 : i64} {
  func.func @_matmul_kernel(%arg0: i32, %arg1: i32, %arg2: i32, %arg3: memref<32x128xf32, #tpu.memory_space<vmem>>, %arg4: memref<128x384xf32, #tpu.memory_space<vmem>>, %arg5: memref<32x384xf32, #tpu.memory_space<vmem>>, %arg6: memref<32x384xf32, #tpu.memory_space<vmem>>) attributes {dimension_semantics = [#tpu.dimension_semantics<parallel>, #tpu.dimension_semantics<parallel>, #tpu.dimension_semantics<arbitrary>], iteration_bounds = array<i64: 1, 1, 1>, scalar_prefetch = 0 : i64, scratch_operands = 1 : i64, tpu.core_type = #tpu.core_type<tc>, window_params = [{transform_indices = @transform_0, window_bounds = array<i64: 32, 128>}, {transform_indices = @transform_1, window_bounds = array<i64: 128, 384>}, {transform_indices = @transform_2, window_bounds = array<i64: 32, 384>}]} {
    %c0_i32 = arith.constant 0 : i32
    %0 = arith.cmpi eq, %arg2, %c0_i32 : i32
    %1 = arith.extui %0 : i1 to i32
    %c0_i32_0 = arith.constant 0 : i32
    %2 = arith.cmpi ne, %1, %c0_i32_0 : i32
    scf.if %2 {
      %cst_10 = arith.constant 0.000000e+00 : f32
      %12 = vector.broadcast %cst_10 : f32 to vector<32x384xf32>
      %c0_11 = arith.constant 0 : index
      %c0_12 = arith.constant 0 : index
      %13 = vector.load %arg6[%c0_11, %c0_12] : memref<32x384xf32, #tpu.memory_space<vmem>>, vector<32x384xf32>
      tpu.vector_store %arg6[%c0_11, %c0_12], %12 {strides = array<i32>} : memref<32x384xf32, #tpu.memory_space<vmem>>, vector<32x384xf32>,
    } else {
    }
    %c0 = arith.constant 0 : index
    %c0_1 = arith.constant 0 : index
    %3 = vector.load %arg6[%c0, %c0_1] : memref<32x384xf32, #tpu.memory_space<vmem>>, vector<32x384xf32>
    %c0_2 = arith.constant 0 : index
    %c0_3 = arith.constant 0 : index
    %4 = vector.load %arg3[%c0_2, %c0_3] : memref<32x128xf32, #tpu.memory_space<vmem>>, vector<32x128xf32>
    %c0_4 = arith.constant 0 : index
    %c0_5 = arith.constant 0 : index
    %5 = vector.load %arg4[%c0_4, %c0_5] : memref<128x384xf32, #tpu.memory_space<vmem>>, vector<128x384xf32>
    %cst = arith.constant dense<0.000000e+00> : vector<32x384xf32>
    %6 = tpu.matmul %4, %5, %cst {dimension_numbers = #tpu.dot_dimension_numbers<[1], [0], [0], [1], [0, 0, 1, 1], [], []>} : vector<32x128xf32>, vector<128x384xf32>, vector<32x384xf32> -> vector<32x384xf32>
    %7 = arith.addf %3, %6 : vector<32x384xf32>
    %c0_6 = arith.constant 0 : index
    %c0_7 = arith.constant 0 : index
    %8 = vector.load %arg6[%c0_6, %c0_7] : memref<32x384xf32, #tpu.memory_space<vmem>>, vector<32x384xf32>
    tpu.vector_store %arg6[%c0_6, %c0_7], %7 {strides = array<i32>} : memref<32x384xf32, #tpu.memory_space<vmem>>, vector<32x384xf32>,
    %c0_i32_8 = arith.constant 0 : i32
    %9 = arith.cmpi eq, %arg2, %c0_i32_8 : i32
    %10 = arith.extui %9 : i1 to i32
    %c0_i32_9 = arith.constant 0 : i32
    %11 = arith.cmpi ne, %10, %c0_i32_9 : i32
    scf.if %11 {
      %c0_10 = arith.constant 0 : index
      %c0_11 = arith.constant 0 : index
      %12 = vector.load %arg6[%c0_10, %c0_11] : memref<32x384xf32, #tpu.memory_space<vmem>>, vector<32x384xf32>
      %c0_12 = arith.constant 0 : index
      %c0_13 = arith.constant 0 : index
      %13 = vector.load %arg5[%c0_12, %c0_13] : memref<32x384xf32, #tpu.memory_space<vmem>>, vector<32x384xf32>
      tpu.vector_store %arg5[%c0_12, %c0_13], %12 {strides = array<i32>} : memref<32x384xf32, #tpu.memory_space<vmem>>, vector<32x384xf32>,
    } else {
    }
    return
  }
  func.func @transform_0(%arg0: i32, %arg1: i32, %arg2: i32) -> (i32, i32) {
    %c0_i32 = arith.constant 0 : i32
    return %arg0, %arg2 : i32, i32
  }
  func.func @transform_1(%arg0: i32, %arg1: i32, %arg2: i32) -> (i32, i32) {
    %c0_i32 = arith.constant 0 : i32
    return %arg2, %arg1 : i32, i32
  }
  func.func @transform_2(%arg0: i32, %arg1: i32, %arg2: i32) -> (i32, i32) {
    %c0_i32 = arith.constant 0 : i32
    return %arg0, %arg1 : i32, i32
  }
}

</mosaic_0001>

<llo_original>
// kernel: tpu_custom_call.1
$region0: #{tpu_custom_call.1}
  #allocation0 [shape = 'u32[]', space=smem, size = 0x4, offset = 0x4, fixed_abs, tag = 'smem constant byte address 0x4 - core index']
  #allocation1 [shape = 'u32[144,128]{1,0:T(1,128)}', space=vmem, size = 0x12000, scoped, tag = 'internal scratch']
  #allocation2 [shape = 'f32[32,384]{1,0:T(8,128)}', space=vmem, size = 0xc000, scoped, tag = 'scratch operand']
  %s0 = inlined_call_operand.hbm [shape: f32[32,128], index: 0, kind: input, shape index: {}]
  %s1 = inlined_call_operand.hbm [shape: f32[128,384], index: 1, kind: input, shape index: {}]
  %s2 = inlined_call_operand.hbm [shape: f32[32,384], index: 2, kind: output, shape index: {}]
  %s3 = sld [smem:[#allocation0]]
  $region34: #{tpu_custom_call.1} parent=0
    _
  %s5 = ssub.s32 1, %s3
  %s6 = scalar_select 0, %s5, %s3
  $region1: #{tpu_custom_call.1} parent=0
    #allocation3 [shape = 'u8[16384]{0}', space=vmem, size = 0x4000, scoped, tag = 'input window, operand 0, single buffered']
    #allocation4 [shape = 's32[1]{0}', space=sflag, size = 0x4, scoped, tag = 'scoped memory for tpu_custom_call.1']
    #allocation5 [shape = 's32[1]{0}', space=sflag, size = 0x4, scoped, tag = 'scoped memory for tpu_custom_call.1']
    #allocation6 [shape = 'u8[196608]{0}', space=vmem, size = 0x30000, scoped, tag = 'input window, operand 1, single buffered']
    #allocation7 [shape = 's32[1]{0}', space=sflag, size = 0x4, scoped, tag = 'scoped memory for tpu_custom_call.1']
    #allocation8 [shape = 'u8[49152]{0}', space=vmem, size = 0xc000, scoped, tag = 'output window, operand 0, single buffered']
    %7 = vsyncpa [#allocation4], 0
    %8 = vsyncpa [#allocation7], 0
    %9 = vsyncpa [#allocation5], 0
    // Predicated region
    $region2: #{tpu_custom_call.1} parent=1 // pred_check
      _
    $region3: #{tpu_custom_call.1} parent=1 // pred_check_branch
      %11 = sbr.rel (0) target = $region5
    $region4: #{tpu_custom_call.1} parent=1 // pred_region
      %s13 = ssub.s32 512, 512
      %14 = vsyncadd [#allocation4], %s13
      %s15 = sshll.u32 [#allocation3], 4
      %s16 = int_to_ptr.vmem [resolvable:$true] %s15
      %21 = dma.hbm_to_vmem [thread:$0]  %s0, 512, %s16, [#allocation4], 128, 128, 8
    $region5: #{tpu_custom_call.1} parent=1 // pred_fallthru
      _
    // Predicated region
    $region6: #{tpu_custom_call.1} parent=1 // pred_check
      _
    $region7: #{tpu_custom_call.1} parent=1 // pred_check_branch
      %23 = sbr.rel (0) target = $region9
    $region8: #{tpu_custom_call.1} parent=1 // pred_region
      %s25 = ssub.s32 6144, 6144
      %26 = vsyncadd [#allocation7], %s25
      %s27 = sshll.u32 [#allocation6], 4
      %s28 = int_to_ptr.vmem [resolvable:$true] %s27
      %33 = dma.hbm_to_vmem [thread:$0]  %s1, 6144, %s28, [#allocation7], 384, 384, 24
    $region9: #{tpu_custom_call.1} parent=1 // pred_fallthru
      _
    // Predicated region
    $region10: #{tpu_custom_call.1} parent=1 // pred_check
      _
    $region11: #{tpu_custom_call.1} parent=1 // pred_check_branch
      %35 = sbr.rel (0) target = $region13
    $region12: #{tpu_custom_call.1} parent=1 // pred_region
      %36 = dma.done [#allocation4], 512
    $region13: #{tpu_custom_call.1} parent=1 // pred_fallthru
      _
    // Predicated region
    $region14: #{tpu_custom_call.1} parent=1 // pred_check
      _
    $region15: #{tpu_custom_call.1} parent=1 // pred_check_branch
      %38 = sbr.rel (0) target = $region17
    $region16: #{tpu_custom_call.1} parent=1 // pred_region
      %39 = dma.done [#allocation7], 6144
    $region17: #{tpu_custom_call.1} parent=1 // pred_fallthru
      _
    %p40 = scmp.eq.s32.totalorder 0, 0
    // Predicated region
    $region18: #{tpu_custom_call.1} parent=1 // pred_check
      %p41 = pneg %p40
    $region19: #{tpu_custom_call.1} parent=1 // pred_check_branch
      %43 = sbr.rel (%p41) target = $region21
    $region20: #{tpu_custom_call.1} parent=1 // pred_region
      %44 = vst [vmem:[#allocation2] sm:$0xff] 0.0
      %45 = vst [vmem:[#allocation2 + $0x8] sm:$0xff] 0.0
      %46 = vst [vmem:[#allocation2 + $0x10] sm:$0xff] 0.0
      %47 = vst [vmem:[#allocation2 + $0x18] sm:$0xff] 0.0
      %48 = vst [vmem:[#allocation2 + $0x20] sm:$0xff] 0.0
      %49 = vst [vmem:[#allocation2 + $0x28] sm:$0xff] 0.0
      %50 = vst [vmem:[#allocation2 + $0x30] sm:$0xff] 0.0
      %51 = vst [vmem:[#allocation2 + $0x38] sm:$0xff] 0.0
      %52 = vst [vmem:[#allocation2 + $0x40] sm:$0xff] 0.0
      %53 = vst [vmem:[#allocation2 + $0x48] sm:$0xff] 0.0
      %54 = vst [vmem:[#allocation2 + $0x50] sm:$0xff] 0.0
      %55 = vst [vmem:[#allocation2 + $0x58] sm:$0xff] 0.0
    $region21: #{tpu_custom_call.1} parent=1 // pred_fallthru
      _
    %v56 = vld [vmem:[#allocation2] sm:$0xff]
    %v57 = vld [vmem:[#allocation2 + $0x8] sm:$0xff]
    %v58 = vld [vmem:[#allocation2 + $0x10] sm:$0xff]
    %v59 = vld [vmem:[#allocation2 + $0x18] sm:$0xff]
    %v60 = vld [vmem:[#allocation2 + $0x20] sm:$0xff]
    %v61 = vld [vmem:[#allocation2 + $0x28] sm:$0xff]
    %v62 = vld [vmem:[#allocation2 + $0x30] sm:$0xff]
    %v63 = vld [vmem:[#allocation2 + $0x38] sm:$0xff]
    %v64 = vld [vmem:[#allocation2 + $0x40] sm:$0xff]
    %v65 = vld [vmem:[#allocation2 + $0x48] sm:$0xff]
    %v66 = vld [vmem:[#allocation2 + $0x50] sm:$0xff]
    %v67 = vld [vmem:[#allocation2 + $0x58] sm:$0xff]
    %v68 = vld [vmem:[#allocation3] sm:$0xff]
    %v69 = vld [vmem:[#allocation3 + $0x8] sm:$0xff]
    %v70 = vld [vmem:[#allocation3 + $0x10] sm:$0xff]
    %v71 = vld [vmem:[#allocation3 + $0x18] sm:$0xff]
    %v72 = vld [vmem:[#allocation6] sm:$0xff]
    %v73 = vld [vmem:[#allocation6 + $0x8] sm:$0xff]
    %v74 = vld [vmem:[#allocation6 + $0x10] sm:$0xff]
    %v75 = vld [vmem:[#allocation6 + $0x18] sm:$0xff]
    %v76 = vld [vmem:[#allocation6 + $0x20] sm:$0xff]
    %v77 = vld [vmem:[#allocation6 + $0x28] sm:$0xff]
    %v78 = vld [vmem:[#allocation6 + $0x30] sm:$0xff]
    %v79 = vld [vmem:[#allocation6 + $0x38] sm:$0xff]
    %v80 = vld [vmem:[#allocation6 + $0x40] sm:$0xff]
    %v81 = vld [vmem:[#allocation6 + $0x48] sm:$0xff]
    %v82 = vld [vmem:[#allocation6 + $0x50] sm:$0xff]
    %v83 = vld [vmem:[#allocation6 + $0x58] sm:$0xff]
    %v84 = vld [vmem:[#allocation6 + $0x60] sm:$0xff]
    %v85 = vld [vmem:[#allocation6 + $0x68] sm:$0xff]
    %v86 = vld [vmem:[#allocation6 + $0x70] sm:$0xff]
    %v87 = vld [vmem:[#allocation6 + $0x78] sm:$0xff]
    %v88 = vld [vmem:[#allocation6 + $0x80] sm:$0xff]
    %v89 = vld [vmem:[#allocation6 + $0x88] sm:$0xff]
    %v90 = vld [vmem:[#allocation6 + $0x90] sm:$0xff]
    %v91 = vld [vmem:[#allocation6 + $0x98] sm:$0xff]
    %v92 = vld [vmem:[#allocation6 + $0xa0] sm:$0xff]
    %v93 = vld [vmem:[#allocation6 + $0xa8] sm:$0xff]
    %v94 = vld [vmem:[#allocation6 + $0xb0] sm:$0xff]
    %v95 = vld [vmem:[#allocation6 + $0xb8] sm:$0xff]
    %v96 = vld [vmem:[#allocation6 + $0xc0] sm:$0xff]
    %v97 = vld [vmem:[#allocation6 + $0xc8] sm:$0xff]
    %v98 = vld [vmem:[#allocation6 + $0xd0] sm:$0xff]
    %v99 = vld [vmem:[#allocation6 + $0xd8] sm:$0xff]
    %v100 = vld [vmem:[#allocation6 + $0xe0] sm:$0xff]
    %v101 = vld [vmem:[#allocation6 + $0xe8] sm:$0xff]
    %v102 = vld [vmem:[#allocation6 + $0xf0] sm:$0xff]
    %v103 = vld [vmem:[#allocation6 + $0xf8] sm:$0xff]
    %v104 = vld [vmem:[#allocation6 + $0x100] sm:$0xff]
    %v105 = vld [vmem:[#allocation6 + $0x108] sm:$0xff]
    %v106 = vld [vmem:[#allocation6 + $0x110] sm:$0xff]
    %v107 = vld [vmem:[#allocation6 + $0x118] sm:$0xff]
    %v108 = vld [vmem:[#allocation6 + $0x120] sm:$0xff]
    %v109 = vld [vmem:[#allocation6 + $0x128] sm:$0xff]
    %v110 = vld [vmem:[#allocation6 + $0x130] sm:$0xff]
    %v111 = vld [vmem:[#allocation6 + $0x138] sm:$0xff]
    %v112 = vld [vmem:[#allocation6 + $0x140] sm:$0xff]
    %v113 = vld [vmem:[#allocation6 + $0x148] sm:$0xff]
    %v114 = vld [vmem:[#allocation6 + $0x150] sm:$0xff]
    %v115 = vld [vmem:[#allocation6 + $0x158] sm:$0xff]
    %v116 = vld [vmem:[#allocation6 + $0x160] sm:$0xff]
    %v117 = vld [vmem:[#allocation6 + $0x168] sm:$0xff]
    %v118 = vld [vmem:[#allocation6 + $0x170] sm:$0xff]
    %v119 = vld [vmem:[#allocation6 + $0x178] sm:$0xff]
    %120 = vmatprep.subr.mxu0 %v73
    %121 = vmatpush1.msra.mxu0 %v72
    %122 = vmatprep.subr.mxu0 %v76
    %123 = vmatpush1.msra.mxu0 %v75
    %124 = vmatprep.subr.mxu0 %v79
    %125 = vmatpush1.msra.mxu0 %v78
    %126 = vmatprep.subr.mxu0 %v82
    %127 = vmatpush1.msra.mxu0 %v81
    %128 = vmatprep.subr.mxu0 %v85
    %129 = vmatpush1.msra.mxu0 %v84
    %130 = vmatprep.subr.mxu0 %v88
    %131 = vmatpush1.msra.mxu0 %v87
    %132 = vmatprep.subr.mxu0 %v91
    %133 = vmatpush1.msra.mxu0 %v90
    %134 = vmatprep.subr.mxu0 %v94
    %135 = vmatpush1.msra.mxu0 %v93
    %136 = vmatprep.subr.mxu0 %v97
    %137 = vmatpush1.msra.mxu0 %v96
    %138 = vmatprep.subr.mxu0 %v100
    %139 = vmatpush1.msra.mxu0 %v99
    %140 = vmatprep.subr.mxu0 %v103
    %141 = vmatpush1.msra.mxu0 %v102
    %142 = vmatprep.subr.mxu0 %v106
    %143 = vmatpush1.msra.mxu0 %v105
    %144 = vmatprep.subr.mxu0 %v109
    %145 = vmatpush1.msra.mxu0 %v108
    %146 = vmatprep.subr.mxu0 %v112
    %147 = vmatpush1.msra.mxu0 %v111
    %148 = vmatprep.subr.mxu0 %v115
    %149 = vmatpush1.msra.mxu0 %v114
    %150 = vmatprep.subr.mxu0 %v118
    %151 = vmatpush1.msra.mxu0 %v117
    %152 = vmatprep.subr.mxu0 0.0
    %153 = vmatpush1.msra.mxu0 0.0
    %154 = vmatprep.subr.mxu0 0.0
    %155 = vmatpush1.msra.mxu0 0.0
    %156 = vmatprep.subr.mxu0 0.0
    %157 = vmatpush1.msra.mxu0 0.0
    %158 = vmatprep.subr.mxu0 0.0
    %159 = vmatpush1.msra.mxu0 0.0
    %160 = vmatprep.subr.mxu0 0.0
    %161 = vmatpush1.msra.mxu0 0.0
    %162 = vmatprep.subr.mxu0 0.0
    %163 = vmatpush1.msra.mxu0 0.0
    %164 = vmatprep.subr.mxu0 0.0
    %165 = vmatpush1.msra.mxu0 0.0
    %166 = vmatprep.subr.mxu0 0.0
    %167 = vmatpush1.msra.mxu0 0.0
    %168 = vmatprep.subr.mxu0 0.0
    %169 = vmatpush1.msra.mxu0 0.0
    %170 = vmatprep.subr.mxu0 0.0
    %171 = vmatpush1.msra.mxu0 0.0
    %172 = vmatprep.subr.mxu0 0.0
    %173 = vmatpush1.msra.mxu0 0.0
    %174 = vmatprep.subr.mxu0 0.0
    %175 = vmatpush1.msra.mxu0 0.0
    %176 = vmatprep.subr.mxu0 0.0
    %177 = vmatpush1.msra.mxu0 0.0
    %178 = vmatprep.subr.mxu0 0.0
    %179 = vmatpush1.msra.mxu0 0.0
    %180 = vmatprep.subr.mxu0 0.0
    %181 = vmatpush1.msra.mxu0 0.0
    %182 = vmatprep.subr.mxu0 0.0
    %183 = vmatpush1.msra.mxu0 0.0
    %184 = vmatprep.mubr.f32.mxu0 0.0
    %185 = vmatmul.mubr.f32.gmra.mrb[0].mxu0 %v68
    %v186 = vpop.f32.mrb[0].mxu0
    %v187 = vadd.f32 0.0, %v186
    %v188 = vpop.f32.mrb[0].mxu0
    %v189 = vadd.f32 0.0, %v188
    %190 = vmatprep.mubr.f32.mxu0 0.0
    %191 = vmatmul.mubr.f32.gmra.mrb[0].mxu0 %v69
    %v192 = vpop.f32.mrb[0].mxu0
    %v193 = vadd.f32 0.0, %v192
    %v194 = vpop.f32.mrb[0].mxu0
    %v195 = vadd.f32 0.0, %v194
    %196 = vmatprep.mubr.f32.mxu0 0.0
    %197 = vmatmul.mubr.f32.gmra.mrb[0].mxu0 %v70
    %v198 = vpop.f32.mrb[0].mxu0
    %v199 = vadd.f32 0.0, %v198
    %v200 = vpop.f32.mrb[0].mxu0
    %v201 = vadd.f32 0.0, %v200
    %202 = vmatprep.mubr.f32.mxu0 0.0
    %203 = vmatmul.mubr.f32.gmra.mrb[0].mxu0 %v71
    %v204 = vpop.f32.mrb[0].mxu0
    %v205 = vadd.f32 0.0, %v204
    %v206 = vpop.f32.mrb[0].mxu0
    %v207 = vadd.f32 0.0, %v206
    %208 = vdwg.mxu0
    %209 = vmatprep.subr.mxu0 0.0
    %210 = vmatpush1.msra.mxu0 %v74
    %211 = vmatprep.subr.mxu0 0.0
    %212 = vmatpush1.msra.mxu0 %v77
    %213 = vmatprep.subr.mxu0 0.0
    %214 = vmatpush1.msra.mxu0 %v80
    %215 = vmatprep.subr.mxu0 0.0
    %216 = vmatpush1.msra.mxu0 %v83
    %217 = vmatprep.subr.mxu0 0.0
    %218 = vmatpush1.msra.mxu0 %v86
    %219 = vmatprep.subr.mxu0 0.0
    %220 = vmatpush1.msra.mxu0 %v89
    %221 = vmatprep.subr.mxu0 0.0
    %222 = vmatpush1.msra.mxu0 %v92
    %223 = vmatprep.subr.mxu0 0.0
    %224 = vmatpush1.msra.mxu0 %v95
    %225 = vmatprep.subr.mxu0 0.0
    %226 = vmatpush1.msra.mxu0 %v98
    %227 = vmatprep.subr.mxu0 0.0
    %228 = vmatpush1.msra.mxu0 %v101
    %229 = vmatprep.subr.mxu0 0.0
    %230 = vmatpush1.msra.mxu0 %v104
    %231 = vmatprep.subr.mxu0 0.0
    %232 = vmatpush1.msra.mxu0 %v107
    %233 = vmatprep.subr.mxu0 0.0
    %234 = vmatpush1.msra.mxu0 %v110
    %235 = vmatprep.subr.mxu0 0.0
    %236 = vmatpush1.msra.mxu0 %v113
    %237 = vmatprep.subr.mxu0 0.0
    %238 = vmatpush1.msra.mxu0 %v116
    %239 = vmatprep.subr.mxu0 0.0
    %240 = vmatpush1.msra.mxu0 %v119
    %241 = vmatprep.subr.mxu0 0.0
    %242 = vmatpush1.msra.mxu0 0.0
    %243 = vmatprep.subr.mxu0 0.0
    %244 = vmatpush1.msra.mxu0 0.0
    %245 = vmatprep.subr.mxu0 0.0
    %246 = vmatpush1.msra.mxu0 0.0
    %247 = vmatprep.subr.mxu0 0.0
    %248 = vmatpush1.msra.mxu0 0.0
    %249 = vmatprep.subr.mxu0 0.0
    %250 = vmatpush1.msra.mxu0 0.0
    %251 = vmatprep.subr.mxu0 0.0
    %252 = vmatpush1.msra.mxu0 0.0
    %253 = vmatprep.subr.mxu0 0.0
    %254 = vmatpush1.msra.mxu0 0.0
    %255 = vmatprep.subr.mxu0 0.0
    %256 = vmatpush1.msra.mxu0 0.0
    %257 = vmatprep.subr.mxu0 0.0
    %258 = vmatpush1.msra.mxu0 0.0
    %259 = vmatprep.subr.mxu0 0.0
    %260 = vmatpush1.msra.mxu0 0.0
    %261 = vmatprep.subr.mxu0 0.0
    %262 = vmatpush1.msra.mxu0 0.0
    %263 = vmatprep.subr.mxu0 0.0
    %264 = vmatpush1.msra.mxu0 0.0
    %265 = vmatprep.subr.mxu0 0.0
    %266 = vmatpush1.msra.mxu0 0.0
    %267 = vmatprep.subr.mxu0 0.0
    %268 = vmatpush1.msra.mxu0 0.0
    %269 = vmatprep.subr.mxu0 0.0
    %270 = vmatpush1.msra.mxu0 0.0
    %271 = vmatprep.subr.mxu0 0.0
    %272 = vmatpush1.msra.mxu0 0.0
    %273 = vmatprep.mubr.f32.mxu0 0.0
    %274 = vmatmul.mubr.f32.gmra.mrb[0].mxu0 %v68
    %v275 = vpop.f32.mrb[0].mxu0
    %v276 = vadd.f32 0.0, %v275
    %v277 = vpop.f32.mrb[0].mxu0
    %278 = vmatprep.mubr.f32.mxu0 0.0
    %279 = vmatmul.mubr.f32.gmra.mrb[0].mxu0 %v69
    %v280 = vpop.f32.mrb[0].mxu0
    %v281 = vadd.f32 0.0, %v280
    %v282 = vpop.f32.mrb[0].mxu0
    %283 = vmatprep.mubr.f32.mxu0 0.0
    %284 = vmatmul.mubr.f32.gmra.mrb[0].mxu0 %v70
    %v285 = vpop.f32.mrb[0].mxu0
    %v286 = vadd.f32 0.0, %v285
    %v287 = vpop.f32.mrb[0].mxu0
    %288 = vmatprep.mubr.f32.mxu0 0.0
    %289 = vmatmul.mubr.f32.gmra.mrb[0].mxu0 %v71
    %v290 = vpop.f32.mrb[0].mxu0
    %v291 = vadd.f32 0.0, %v290
    %v292 = vpop.f32.mrb[0].mxu0
    %293 = vdwg.mxu0
    %v294 = vadd.f32 %v56, %v187
    %v295 = vadd.f32 %v57, %v189
    %v296 = vadd.f32 %v58, %v276
    %v297 = vadd.f32 %v59, %v193
    %v298 = vadd.f32 %v60, %v195
    %v299 = vadd.f32 %v61, %v281
    %v300 = vadd.f32 %v62, %v199
    %v301 = vadd.f32 %v63, %v201
    %v302 = vadd.f32 %v64, %v286
    %v303 = vadd.f32 %v65, %v205
    %v304 = vadd.f32 %v66, %v207
    %v305 = vadd.f32 %v67, %v291
    %306 = vst [vmem:[#allocation2] sm:$0xff] %v294
    %307 = vst [vmem:[#allocation2 + $0x8] sm:$0xff] %v295
    %308 = vst [vmem:[#allocation2 + $0x10] sm:$0xff] %v296
    %309 = vst [vmem:[#allocation2 + $0x18] sm:$0xff] %v297
    %310 = vst [vmem:[#allocation2 + $0x20] sm:$0xff] %v298
    %311 = vst [vmem:[#allocation2 + $0x28] sm:$0xff] %v299
    %312 = vst [vmem:[#allocation2 + $0x30] sm:$0xff] %v300
    %313 = vst [vmem:[#allocation2 + $0x38] sm:$0xff] %v301
    %314 = vst [vmem:[#allocation2 + $0x40] sm:$0xff] %v302
    %315 = vst [vmem:[#allocation2 + $0x48] sm:$0xff] %v303
    %316 = vst [vmem:[#allocation2 + $0x50] sm:$0xff] %v304
    %317 = vst [vmem:[#allocation2 + $0x58] sm:$0xff] %v305
    // Predicated region
    $region22: #{tpu_custom_call.1} parent=1 // pred_check
      %p318 = pneg %p40
    $region23: #{tpu_custom_call.1} parent=1 // pred_check_branch
      %320 = sbr.rel (%p318) target = $region25
    $region24: #{tpu_custom_call.1} parent=1 // pred_region
      %v321 = vld [vmem:[#allocation2] sm:$0xff]
      %v322 = vld [vmem:[#allocation2 + $0x8] sm:$0xff]
      %v323 = vld [vmem:[#allocation2 + $0x10] sm:$0xff]
      %v324 = vld [vmem:[#allocation2 + $0x18] sm:$0xff]
      %v325 = vld [vmem:[#allocation2 + $0x20] sm:$0xff]
      %v326 = vld [vmem:[#allocation2 + $0x28] sm:$0xff]
      %v327 = vld [vmem:[#allocation2 + $0x30] sm:$0xff]
      %v328 = vld [vmem:[#allocation2 + $0x38] sm:$0xff]
      %v329 = vld [vmem:[#allocation2 + $0x40] sm:$0xff]
      %v330 = vld [vmem:[#allocation2 + $0x48] sm:$0xff]
      %v331 = vld [vmem:[#allocation2 + $0x50] sm:$0xff]
      %v332 = vld [vmem:[#allocation2 + $0x58] sm:$0xff]
      %333 = vst [vmem:[#allocation8] sm:$0xff] %v321
      %334 = vst [vmem:[#allocation8 + $0x8] sm:$0xff] %v322
      %335 = vst [vmem:[#allocation8 + $0x10] sm:$0xff] %v323
      %336 = vst [vmem:[#allocation8 + $0x18] sm:$0xff] %v324
      %337 = vst [vmem:[#allocation8 + $0x20] sm:$0xff] %v325
      %338 = vst [vmem:[#allocation8 + $0x28] sm:$0xff] %v326
      %339 = vst [vmem:[#allocation8 + $0x30] sm:$0xff] %v327
      %340 = vst [vmem:[#allocation8 + $0x38] sm:$0xff] %v328
      %341 = vst [vmem:[#allocation8 + $0x40] sm:$0xff] %v329
      %342 = vst [vmem:[#allocation8 + $0x48] sm:$0xff] %v330
      %343 = vst [vmem:[#allocation8 + $0x50] sm:$0xff] %v331
      %344 = vst [vmem:[#allocation8 + $0x58] sm:$0xff] %v332
    $region25: #{tpu_custom_call.1} parent=1 // pred_fallthru
      _
    // Predicated region
    $region26: #{tpu_custom_call.1} parent=1 // pred_check
      _
    $region27: #{tpu_custom_call.1} parent=1 // pred_check_branch
      %346 = sbr.rel (0) target = $region29
    $region28: #{tpu_custom_call.1} parent=1 // pred_region
      %s348 = ssub.s32 1536, 1536
      %349 = vsyncadd [#allocation5], %s348
      %s350 = sshll.u32 [#allocation8], 4
      %s351 = int_to_ptr.vmem [resolvable:$true] %s350
      %356 = dma.vmem_to_hbm [thread:$0]  %s351, 1536, %s2, [#allocation5], 384, 384, 24
    $region29: #{tpu_custom_call.1} parent=1 // pred_fallthru
      _
    // Predicated region
    $region30: #{tpu_custom_call.1} parent=1 // pred_check
      _
    $region31: #{tpu_custom_call.1} parent=1 // pred_check_branch
      %358 = sbr.rel (0) target = $region33
    $region32: #{tpu_custom_call.1} parent=1 // pred_region
      %359 = dma.done [#allocation5], 1536
    $region33: #{tpu_custom_call.1} parent=1 // pred_fallthru
      _
    %360 = vsyncpa [#allocation4], 1
    %361 = vsyncpa [#allocation7], 1
    %362 = vsyncpa [#allocation5], 1

</llo_original>
